<compile_context>
chip_gen: v6e
topology: v6e:2x2x1
jax: 0.10.0
libtpu: 0.0.40
codegen_flags: <defaults>
</compile_context>

<pallas_src>
import jax
import jax.numpy as jnp
from jax.experimental import pallas as pl
from jax.experimental.pallas import tpu as pltpu

LANE = 128  # vreg lane width


def _round_up(x, m):
    return ((x + m - 1) // m) * m


def _sublane(itemsize):
    # Packed sublane tile height: 8 rows for 4-byte, 16 for 2-byte, 32 for 1-byte.
    return max(8, 32 // int(itemsize))


def _vmem_tile_bytes(rows, cols, itemsize):
    # VMEM tiles are padded to (sublane, 128).
    return _round_up(rows, _sublane(itemsize)) * _round_up(cols, LANE) * int(itemsize)


def mlp_kernel(x_ref, w1_ref, b1_ref, w2_ref, b2_ref, w3_ref, b3_ref, o_ref):
    # Layer 1: cast x to the weight dtype in-kernel (VPU work hidden under DMA).
    x = x_ref[...]
    if x.dtype != w1_ref.dtype:
        x = x.astype(w1_ref.dtype)
    h1 = jnp.dot(x, w1_ref[...], preferred_element_type=jnp.float32)
    h1 = jnp.tanh(h1 + b1_ref[...])              # bias/tanh stay f32 (v5e VPU/EUP)
    # Layer 2
    h2 = jnp.dot(h1.astype(w2_ref.dtype), w2_ref[...],
                 preferred_element_type=jnp.float32)
    h2 = jnp.tanh(h2 + b2_ref[...])
    # Layer 3 (no activation); lane store is num_outputs wide (masked if < 128).
    out = jnp.dot(h2.astype(w3_ref.dtype), w3_ref[...],
                  preferred_element_type=jnp.float32)
    o_ref[...] = (out + b3_ref[...]).astype(o_ref.dtype)


def neural_net_forward(x, w1, b1, w2, b2, w3, b3, *, block_b=512):
    """Forward pass equivalent to the PyTorch NeuralNet module.

    x:  [B, num_inputs]
    wK: [in_features, out_features]  (transpose of nn.Linear's [out, in])
    bK: [1, out_features]
    """
    B, num_inputs = x.shape
    num_hidden1 = w1.shape[1]
    num_hidden2 = w2.shape[1]
    num_outputs = w3.shape[1]

    # Batch tile: multiple of the packed sublane tile of the narrowest matmul
    # operand dtype (8 for f32, 16 for bf16). No wrapper-side padding of x;
    # the grid uses cdiv and Pallas masks the ragged edge block.
    sub = _sublane(min(x.dtype.itemsize, w1.dtype.itemsize))
    tb = max(sub, (block_b // sub) * sub)
    tb = min(tb, _round_up(B, sub))
    # v7x megacore: keep at least 2 grid steps so both TensorCores get work.
    if B >= 2 * sub:
        tb = min(tb, _round_up(pl.cdiv(B, 2), sub))
    grid = (pl.cdiv(B, tb),)

    # VMEM budget: double-buffered x/out tiles + resident weights + f32 intermediates.
    vmem_est = (2 * _vmem_tile_bytes(tb, num_inputs, x.dtype.itemsize)
                + 2 * _vmem_tile_bytes(tb, num_outputs, 4)
                + 2 * sum(_vmem_tile_bytes(a.shape[0], a.shape[1], a.dtype.itemsize)
                          for a in (w1, b1, w2, b2, w3, b3))
                + _vmem_tile_bytes(tb, num_hidden1, 4)
                + _vmem_tile_bytes(tb, num_hidden2, 4))
    compiler_kwargs = dict(dimension_semantics=("parallel",))
    if vmem_est > 16 * 1024 * 1024:  # above v5e's scoped default -> set explicitly
        compiler_kwargs["vmem_limit_bytes"] = int(
            min(64 * 1024 * 1024, max(2 * vmem_est, 32 * 1024 * 1024)))

    # Advisory cost estimate consistent with the real traffic (actual dtypes,
    # unpadded f32 output).
    flops = 2 * B * (num_inputs * num_hidden1
                     + num_hidden1 * num_hidden2
                     + num_hidden2 * num_outputs)
    bytes_accessed = (int(x.size) * x.dtype.itemsize
                      + sum(int(a.size) * a.dtype.itemsize
                            for a in (w1, b1, w2, b2, w3, b3))
                      + B * num_outputs * 4)
    cost = pl.CostEstimate(flops=flops,
                           transcendentals=B * (num_hidden1 + num_hidden2),
                           bytes_accessed=bytes_accessed)

    def resident(a):
        return pl.BlockSpec(a.shape, lambda i: (0, 0))

    return pl.pallas_call(
        mlp_kernel,
        out_shape=jax.ShapeDtypeStruct((B, num_outputs), jnp.float32),
        grid=grid,
        in_specs=[
            pl.BlockSpec((tb, num_inputs), lambda i: (i, 0)),  # x: batch-tiled
            resident(w1), resident(b1),                        # weights/biases resident
            resident(w2), resident(b2),
            resident(w3), resident(b3),
        ],
        out_specs=pl.BlockSpec((tb, num_outputs), lambda i: (i, 0)),
        compiler_params=pltpu.CompilerParams(**compiler_kwargs),
        cost_estimate=cost,
    )(x, w1, b1, w2, b2, w3, b3)


def cast_params_bf16(w1, b1, w2, b2, w3, b3):
    """Optional one-time bf16 pre-cast of the weights (do this at setup, not per
    call). Biases stay f32 so the bias-add/tanh path remains f32; x is cast
    in-kernel."""
    return (w1.astype(jnp.bfloat16), b1,
            w2.astype(jnp.bfloat16), b2,
            w3.astype(jnp.bfloat16), b3)


def init_params(key, num_inputs, num_hidden1, num_hidden2, num_outputs):
    """Deterministic synthetic init mimicking nn.Linear's uniform(-1/sqrt(fan_in), ...)."""
    ks = jax.random.split(key, 6)

    def linear(kw, kb, fan_in, fan_out):
        bound = 1.0 / jnp.sqrt(fan_in)
        w = jax.random.uniform(kw, (fan_in, fan_out), jnp.float32, -bound, bound)
        b = jax.random.uniform(kb, (1, fan_out), jnp.float32, -bound, bound)
        return w, b

    w1, b1 = linear(ks[0], ks[1], num_inputs, num_hidden1)
    w2, b2 = linear(ks[2], ks[3], num_hidden1, num_hidden2)
    w3, b3 = linear(ks[4], ks[5], num_hidden2, num_outputs)
    return w1, b1, w2, b2, w3, b3


if __name__ == "__main__":
    # Small shapes consistent with the module's forward: x is [batch, num_inputs].
    # batch deliberately NOT a multiple of the tile height to exercise the
    # masked ragged-edge path (no wrapper padding anymore).
    batch = 20
    num_inputs, num_hidden1, num_hidden2, num_outputs = 32, 64, 64, 16

    key = jax.random.PRNGKey(0)
    kx, kp = jax.random.split(key)
    x = jax.random.normal(kx, (batch, num_inputs), jnp.float32)
    params = init_params(kp, num_inputs, num_hidden1, num_hidden2, num_outputs)
    w1, b1, w2, b2, w3, b3 = params

    # Pure-JAX f32 reference (same semantics as the PyTorch module).
    ref = jnp.tanh(x @ w1 + b1)
    ref = jnp.tanh(ref @ w2 + b2)
    ref = ref @ w3 + b3

    # Default path: f32 operands, multi-step grid (>=2 steps), ragged last block.
    out = jax.block_until_ready(neural_net_forward(x, *params))
    assert out.shape == (batch, num_outputs)
    assert jnp.allclose(out, ref, atol=2e-2, rtol=2e-2), \
        float(jnp.max(jnp.abs(out - ref)))

    # Small batch tile (multiple of 8) exercising the pipelined multi-step path.
    out2 = jax.block_until_ready(neural_net_forward(x, *params, block_b=16))
    assert jnp.allclose(out2, ref, atol=2e-2, rtol=2e-2), \
        float(jnp.max(jnp.abs(out2 - ref)))

    # Optional bf16 weight path: weights pre-cast once, x cast in-kernel,
    # tb rounded to multiples of 16 (bf16 packed sublane tile).
    params_bf16 = cast_params_bf16(*params)
    out3 = jax.block_until_ready(neural_net_forward(x, *params_bf16))
    assert jnp.allclose(out3, ref, atol=2e-2, rtol=2e-2), \
        float(jnp.max(jnp.abs(out3 - ref)))

    print("KERNEL_OK")
</pallas_src>

<mosaic_0001>
module attributes {stable_mosaic.version = 11 : i64} {
  func.func @mlp_kernel(%arg0: i32, %arg1: memref<16x32xf32, #tpu.memory_space<vmem>>, %arg2: memref<32x64xf32, #tpu.memory_space<vmem>>, %arg3: memref<1x64xf32, #tpu.memory_space<vmem>>, %arg4: memref<64x64xf32, #tpu.memory_space<vmem>>, %arg5: memref<1x64xf32, #tpu.memory_space<vmem>>, %arg6: memref<64x16xf32, #tpu.memory_space<vmem>>, %arg7: memref<1x16xf32, #tpu.memory_space<vmem>>, %arg8: memref<16x16xf32, #tpu.memory_space<vmem>>) attributes {dimension_semantics = [#tpu.dimension_semantics<parallel>], iteration_bounds = array<i64: 2>, scalar_prefetch = 0 : i64, scratch_operands = 0 : i64, tpu.core_type = #tpu.core_type<tc>, window_params = [{transform_indices = @transform_0, window_bounds = array<i64: 16, 32>}, {pipeline_mode = #tpu.pipeline_mode<synchronous>, transform_indices = @transform_1, window_bounds = array<i64: 32, 64>}, {pipeline_mode = #tpu.pipeline_mode<synchronous>, transform_indices = @transform_2, window_bounds = array<i64: 1, 64>}, {pipeline_mode = #tpu.pipeline_mode<synchronous>, transform_indices = @transform_3, window_bounds = array<i64: 64, 64>}, {pipeline_mode = #tpu.pipeline_mode<synchronous>, transform_indices = @transform_4, window_bounds = array<i64: 1, 64>}, {pipeline_mode = #tpu.pipeline_mode<synchronous>, transform_indices = @transform_5, window_bounds = array<i64: 64, 16>}, {pipeline_mode = #tpu.pipeline_mode<synchronous>, transform_indices = @transform_6, window_bounds = array<i64: 1, 16>}, {transform_indices = @transform_7, window_bounds = array<i64: 16, 16>}]} {
    %c0 = arith.constant 0 : index
    %c0_0 = arith.constant 0 : index
    %0 = vector.load %arg1[%c0, %c0_0] : memref<16x32xf32, #tpu.memory_space<vmem>>, vector<16x32xf32>
    %c0_1 = arith.constant 0 : index
    %c0_2 = arith.constant 0 : index
    %1 = vector.load %arg2[%c0_1, %c0_2] : memref<32x64xf32, #tpu.memory_space<vmem>>, vector<32x64xf32>
    %cst = arith.constant dense<0.000000e+00> : vector<16x64xf32>
    %2 = tpu.matmul %0, %1, %cst {dimension_numbers = #tpu.dot_dimension_numbers<[1], [0], [0], [1], [0, 0, 1, 1], [], []>} : vector<16x32xf32>, vector<32x64xf32>, vector<16x64xf32> -> vector<16x64xf32>
    %c0_3 = arith.constant 0 : index
    %c0_4 = arith.constant 0 : index
    %3 = vector.load %arg3[%c0_3, %c0_4] : memref<1x64xf32, #tpu.memory_space<vmem>>, vector<1x64xf32>
    %4 = vector.broadcast %3 : vector<1x64xf32> to vector<16x64xf32>
    %5 = arith.addf %2, %4 : vector<16x64xf32>
    %6 = math.tanh %5 : vector<16x64xf32>
    %c0_5 = arith.constant 0 : index
    %c0_6 = arith.constant 0 : index
    %7 = vector.load %arg4[%c0_5, %c0_6] : memref<64x64xf32, #tpu.memory_space<vmem>>, vector<64x64xf32>
    %cst_7 = arith.constant dense<0.000000e+00> : vector<16x64xf32>
    %8 = tpu.matmul %6, %7, %cst_7 {dimension_numbers = #tpu.dot_dimension_numbers<[1], [0], [0], [1], [0, 0, 1, 1], [], []>} : vector<16x64xf32>, vector<64x64xf32>, vector<16x64xf32> -> vector<16x64xf32>
    %c0_8 = arith.constant 0 : index
    %c0_9 = arith.constant 0 : index
    %9 = vector.load %arg5[%c0_8, %c0_9] : memref<1x64xf32, #tpu.memory_space<vmem>>, vector<1x64xf32>
    %10 = vector.broadcast %9 : vector<1x64xf32> to vector<16x64xf32>
    %11 = arith.addf %8, %10 : vector<16x64xf32>
    %12 = math.tanh %11 : vector<16x64xf32>
    %c0_10 = arith.constant 0 : index
    %c0_11 = arith.constant 0 : index
    %13 = vector.load %arg6[%c0_10, %c0_11] : memref<64x16xf32, #tpu.memory_space<vmem>>, vector<64x16xf32>
    %cst_12 = arith.constant dense<0.000000e+00> : vector<16x16xf32>
    %14 = tpu.matmul %12, %13, %cst_12 {dimension_numbers = #tpu.dot_dimension_numbers<[1], [0], [0], [1], [0, 0, 1, 1], [], []>} : vector<16x64xf32>, vector<64x16xf32>, vector<16x16xf32> -> vector<16x16xf32>
    %c0_13 = arith.constant 0 : index
    %c0_14 = arith.constant 0 : index
    %15 = vector.load %arg7[%c0_13, %c0_14] : memref<1x16xf32, #tpu.memory_space<vmem>>, vector<1x16xf32>
    %16 = vector.broadcast %15 : vector<1x16xf32> to vector<16x16xf32>
    %17 = arith.addf %14, %16 : vector<16x16xf32>
    %c0_15 = arith.constant 0 : index
    %c0_16 = arith.constant 0 : index
    %18 = vector.load %arg8[%c0_15, %c0_16] : memref<16x16xf32, #tpu.memory_space<vmem>>, vector<16x16xf32>
    tpu.vector_store %arg8[%c0_15, %c0_16], %17 {strides = array<i32>} : memref<16x16xf32, #tpu.memory_space<vmem>>, vector<16x16xf32>,
    return
  }
  func.func @transform_0(%arg0: i32) -> (i32, i32) {
    %c0_i32 = arith.constant 0 : i32
    %c0_i32_0 = arith.constant 0 : i32
    return %arg0, %c0_i32 : i32, i32
  }
  func.func @transform_1(%arg0: i32) -> (i32, i32) {
    %c0_i32 = arith.constant 0 : i32
    %c0_i32_0 = arith.constant 0 : i32
    %c0_i32_1 = arith.constant 0 : i32
    return %c0_i32, %c0_i32_0 : i32, i32
  }
  func.func @transform_2(%arg0: i32) -> (i32, i32) {
    %c0_i32 = arith.constant 0 : i32
    %c0_i32_0 = arith.constant 0 : i32
    %c0_i32_1 = arith.constant 0 : i32
    return %c0_i32, %c0_i32_0 : i32, i32
  }
  func.func @transform_3(%arg0: i32) -> (i32, i32) {
    %c0_i32 = arith.constant 0 : i32
    %c0_i32_0 = arith.constant 0 : i32
    %c0_i32_1 = arith.constant 0 : i32
    return %c0_i32, %c0_i32_0 : i32, i32
  }
  func.func @transform_4(%arg0: i32) -> (i32, i32) {
    %c0_i32 = arith.constant 0 : i32
    %c0_i32_0 = arith.constant 0 : i32
    %c0_i32_1 = arith.constant 0 : i32
    return %c0_i32, %c0_i32_0 : i32, i32
  }
  func.func @transform_5(%arg0: i32) -> (i32, i32) {
    %c0_i32 = arith.constant 0 : i32
    %c0_i32_0 = arith.constant 0 : i32
    %c0_i32_1 = arith.constant 0 : i32
    return %c0_i32, %c0_i32_0 : i32, i32
  }
  func.func @transform_6(%arg0: i32) -> (i32, i32) {
    %c0_i32 = arith.constant 0 : i32
    %c0_i32_0 = arith.constant 0 : i32
    %c0_i32_1 = arith.constant 0 : i32
    return %c0_i32, %c0_i32_0 : i32, i32
  }
  func.func @transform_7(%arg0: i32) -> (i32, i32) {
    %c0_i32 = arith.constant 0 : i32
    %c0_i32_0 = arith.constant 0 : i32
    return %arg0, %c0_i32 : i32, i32
  }
}

</mosaic_0001>

<llo_original>
// kernel: tpu_custom_call.1
$region0: #{tpu_custom_call.1}
  #allocation0 [shape = 'u32[]', space=smem, size = 0x4, offset = 0x4, fixed_abs, tag = 'smem constant byte address 0x4 - core index']
  #allocation1 [shape = 'u32[144,128]{1,0:T(1,128)}', space=vmem, size = 0x12000, scoped, tag = 'internal scratch']
  %s0 = inlined_call_operand.hbm [shape: f32[20,32], index: 0, kind: input, shape index: {}]
  %s1 = inlined_call_operand.hbm [shape: f32[32,64], index: 1, kind: input, shape index: {}]
  %s2 = inlined_call_operand.vmem [shape: f32[1,64], index: 2, kind: input, shape index: {}]
  %s3 = inlined_call_operand.vmem [shape: f32[64,64], index: 3, kind: input, shape index: {}]
  %s4 = inlined_call_operand.vmem [shape: f32[1,64], index: 4, kind: input, shape index: {}]
  %s5 = inlined_call_operand.vmem [shape: f32[64,16], index: 5, kind: input, shape index: {}]
  %s6 = inlined_call_operand.vmem [shape: f32[1,16], index: 6, kind: input, shape index: {}]
  %s7 = inlined_call_operand.vmem [shape: f32[20,16], index: 7, kind: output, shape index: {}]
  %s8 = sld [smem:[#allocation0]]
  $region117: #{tpu_custom_call.1} parent=0
    _
  %s10 = ssub.s32 1, %s8
  %s11 = scalar_select 0, %s10, %s8
  $region1: #{tpu_custom_call.1} parent=0
    #allocation2 [shape = 'u8[16384]{0}', space=vmem, size = 0x4000, scoped, tag = 'input window, operand 0']
    #allocation3 [shape = 's32[2]{0}', space=sflag, size = 0x8, scoped, tag = 'scoped memory for tpu_custom_call.1']
    #allocation4 [shape = 'u8[16384]{0}', space=vmem, size = 0x4000, scoped, tag = 'input window, operand 1, single buffered']
    #allocation5 [shape = 's32[1]{0}', space=sflag, size = 0x4, scoped, tag = 'scoped memory for tpu_custom_call.1']
    #allocation6 [shape = 'u8[16384]{0}', space=vmem, size = 0x4000, scoped, tag = 'output window, operand 0']
    %12 = vsyncpa [#allocation3], 0
    %s13 = scalar_lea.sflag [#allocation3], 1
    %14 = vsyncpa %s13, 0
    %15 = vsyncpa [#allocation5], 0
    loop: start=0, step=1, limit=4
    $region2: #{tpu_custom_call.1} parent=1 // loop_pre_header
      _
    $region3: #{tpu_custom_call.1} parent=1 // loop_header
      %s17 = sphi 0, %s21
      %p18 = scmp.ge.s32.totalorder %s17, 4
      %s27 = sphi 0, %s29
      %s30 = sphi 0, %s27
      %s31 = sphi 0, %s30
      %s47 = sphi 0, %s31
      %s51 = sphi 0, %s51
      %s53 = sphi 0, %s51
      %s54 = sphi 0, %s53
      %s68 = sphi 0, %s54
      %s72 = sphi 0, %s72
      %s74 = sphi 0, %s72
      %s75 = sphi 0, %s74
      %s89 = sphi 0, %s75
      %s93 = sphi 0, %s93
      %s95 = sphi 0, %s93
      %s96 = sphi 0, %s95
      %s110 = sphi 0, %s96
      %s114 = sphi 0, %s114
      %s116 = sphi 0, %s114
      %s117 = sphi 0, %s116
      %s131 = sphi 0, %s117
      %s135 = sphi 0, %s135
      %s137 = sphi 0, %s135
      %s138 = sphi 0, %s137
      %s152 = sphi 0, %s138
      %s156 = sphi 0, %s156
      %s158 = sphi 0, %s156
      %s159 = sphi 0, %s158
      %s173 = sphi 0, %s159
      %s179 = sphi 0, %s181
      %s182 = sphi 0, %s179
      %s183 = sphi 0, %s182
      %s199 = sphi 0, %s183
    $region4: #{tpu_custom_call.1} parent=1 // loop_header_branch
      %20 = sbr.rel (%p18) target = $region8
    $region5: #{tpu_custom_call.1} parent=1 // loop_body
      %s22 = ssub.s32 %s17, 1
      %s23 = ssub.s32 %s17, 2
      %s24 = sadd.s32 %s17, 1
      %s25 = ssub.s32 %s17, %s24
      %p26 = scmp.eq.s32.totalorder %s25, 0
      %s28 = sadd.s32 %s27, 1
      %s29 = scalar_select %p26, %s27, %s28
      %p32 = pneg %p26
      %p33 = scmp.eq.s32.totalorder %s17, 1
      %p34 = por %p32, %p33
      %p35 = scmp.ne.s32.totalorder %s27, %s30
      %p36 = scmp.eq.s32.totalorder %s17, 0
      %p37 = por %p35, %p36
      %p38 = scmp.ne.s32.totalorder %s27, %s30
      %p39 = scmp.eq.s32.totalorder %s22, 1
      %p40 = por %p38, %p39
      %p41 = scmp.ne.s32.totalorder %s30, %s31
      %p42 = scmp.eq.s32.totalorder %s22, 0
      %p43 = por %p41, %p42
      %p44 = scmp.ne.s32.totalorder %s30, %s31
      %p45 = scmp.eq.s32.totalorder %s23, 1
      %p46 = por %p44, %p45
      %p48 = scmp.ne.s32.totalorder %s31, %s47
      %p49 = scmp.eq.s32.totalorder %s23, 0
      %p50 = por %p48, %p49
      %s52 = sadd.s32 %s51, 1
      %p55 = scmp.eq.s32.totalorder %s17, 1
      %p56 = scmp.ne.s32.totalorder %s51, %s53
      %p57 = scmp.eq.s32.totalorder %s17, 0
      %p58 = por %p56, %p57
      %p59 = scmp.ne.s32.totalorder %s51, %s53
      %p60 = scmp.eq.s32.totalorder %s22, 1
      %p61 = por %p59, %p60
      %p62 = scmp.ne.s32.totalorder %s53, %s54
      %p63 = scmp.eq.s32.totalorder %s22, 0
      %p64 = por %p62, %p63
      %p65 = scmp.ne.s32.totalorder %s53, %s54
      %p66 = scmp.eq.s32.totalorder %s23, 1
      %p67 = por %p65, %p66
      %p69 = scmp.ne.s32.totalorder %s54, %s68
      %p70 = scmp.eq.s32.totalorder %s23, 0
      %p71 = por %p69, %p70
      %s73 = sadd.s32 %s72, 1
      %p76 = scmp.eq.s32.totalorder %s17, 1
      %p77 = scmp.ne.s32.totalorder %s72, %s74
      %p78 = scmp.eq.s32.totalorder %s17, 0
      %p79 = por %p77, %p78
      %p80 = scmp.ne.s32.totalorder %s72, %s74
      %p81 = scmp.eq.s32.totalorder %s22, 1
      %p82 = por %p80, %p81
      %p83 = scmp.ne.s32.totalorder %s74, %s75
      %p84 = scmp.eq.s32.totalorder %s22, 0
      %p85 = por %p83, %p84
      %p86 = scmp.ne.s32.totalorder %s74, %s75
      %p87 = scmp.eq.s32.totalorder %s23, 1
      %p88 = por %p86, %p87
      %p90 = scmp.ne.s32.totalorder %s75, %s89
      %p91 = scmp.eq.s32.totalorder %s23, 0
      %p92 = por %p90, %p91
      %s94 = sadd.s32 %s93, 1
      %p97 = scmp.eq.s32.totalorder %s17, 1
      %p98 = scmp.ne.s32.totalorder %s93, %s95
      %p99 = scmp.eq.s32.totalorder %s17, 0
      %p100 = por %p98, %p99
      %p101 = scmp.ne.s32.totalorder %s93, %s95
      %p102 = scmp.eq.s32.totalorder %s22, 1
      %p103 = por %p101, %p102
      %p104 = scmp.ne.s32.totalorder %s95, %s96
      %p105 = scmp.eq.s32.totalorder %s22, 0
      %p106 = por %p104, %p105
      %p107 = scmp.ne.s32.totalorder %s95, %s96
      %p108 = scmp.eq.s32.totalorder %s23, 1
      %p109 = por %p107, %p108
      %p111 = scmp.ne.s32.totalorder %s96, %s110
      %p112 = scmp.eq.s32.totalorder %s23, 0
      %p113 = por %p111, %p112
      %s115 = sadd.s32 %s114, 1
      %p118 = scmp.eq.s32.totalorder %s17, 1
      %p119 = scmp.ne.s32.totalorder %s114, %s116
      %p120 = scmp.eq.s32.totalorder %s17, 0
      %p121 = por %p119, %p120
      %p122 = scmp.ne.s32.totalorder %s114, %s116
      %p123 = scmp.eq.s32.totalorder %s22, 1
      %p124 = por %p122, %p123
      %p125 = scmp.ne.s32.totalorder %s116, %s117
      %p126 = scmp.eq.s32.totalorder %s22, 0
      %p127 = por %p125, %p126
      %p128 = scmp.ne.s32.totalorder %s116, %s117
      %p129 = scmp.eq.s32.totalorder %s23, 1
      %p130 = por %p128, %p129
      %p132 = scmp.ne.s32.totalorder %s117, %s131
      %p133 = scmp.eq.s32.totalorder %s23, 0
      %p134 = por %p132, %p133
      %s136 = sadd.s32 %s135, 1
      %p139 = scmp.eq.s32.totalorder %s17, 1
      %p140 = scmp.ne.s32.totalorder %s135, %s137
      %p141 = scmp.eq.s32.totalorder %s17, 0
      %p142 = por %p140, %p141
      %p143 = scmp.ne.s32.totalorder %s135, %s137
      %p144 = scmp.eq.s32.totalorder %s22, 1
      %p145 = por %p143, %p144
      %p146 = scmp.ne.s32.totalorder %s137, %s138
      %p147 = scmp.eq.s32.totalorder %s22, 0
      %p148 = por %p146, %p147
      %p149 = scmp.ne.s32.totalorder %s137, %s138
      %p150 = scmp.eq.s32.totalorder %s23, 1
      %p151 = por %p149, %p150
      %p153 = scmp.ne.s32.totalorder %s138, %s152
      %p154 = scmp.eq.s32.totalorder %s23, 0
      %p155 = por %p153, %p154
      %s157 = sadd.s32 %s156, 1
      %p160 = scmp.eq.s32.totalorder %s17, 1
      %p161 = scmp.ne.s32.totalorder %s156, %s158
      %p162 = scmp.eq.s32.totalorder %s17, 0
      %p163 = por %p161, %p162
      %p164 = scmp.ne.s32.totalorder %s156, %s158
      %p165 = scmp.eq.s32.totalorder %s22, 1
      %p166 = por %p164, %p165
      %p167 = scmp.ne.s32.totalorder %s158, %s159
      %p168 = scmp.eq.s32.totalorder %s22, 0
      %p169 = por %p167, %p168
      %p170 = scmp.ne.s32.totalorder %s158, %s159
      %p171 = scmp.eq.s32.totalorder %s23, 1
      %p172 = por %p170, %p171
      %p174 = scmp.ne.s32.totalorder %s159, %s173
      %p175 = scmp.eq.s32.totalorder %s23, 0
      %p176 = por %p174, %p175
      %s177 = ssub.s32 %s17, %s24
      %p178 = scmp.eq.s32.totalorder %s177, 0
      %s180 = sadd.s32 %s179, 1
      %s181 = scalar_select %p178, %s179, %s180
      %p184 = pneg %p178
      %p185 = scmp.eq.s32.totalorder %s17, 1
      %p186 = por %p184, %p185
      %p187 = scmp.ne.s32.totalorder %s179, %s182
      %p188 = scmp.eq.s32.totalorder %s17, 0
      %p189 = por %p187, %p188
      %p190 = scmp.ne.s32.totalorder %s179, %s182
      %p191 = scmp.eq.s32.totalorder %s22, 1
      %p192 = por %p190, %p191
      %p193 = scmp.ne.s32.totalorder %s182, %s183
      %p194 = scmp.eq.s32.totalorder %s22, 0
      %p195 = por %p193, %p194
      %p196 = scmp.ne.s32.totalorder %s182, %s183
      %p197 = scmp.eq.s32.totalorder %s23, 1
      %p198 = por %p196, %p197
      %p200 = scmp.ne.s32.totalorder %s183, %s199
      %p201 = scmp.eq.s32.totalorder %s23, 0
      %p202 = por %p200, %p201
      %p203 = scmp.le.s32.totalorder 1, %s17
      %p204 = scmp.lt.s32.totalorder %s17, 3
      %p205 = pnand %p203, %p204
      %p206 = pneg %p205
      // Predicated region
      $region9: #{tpu_custom_call.1} parent=5 // pred_check
        _
      $region10: #{tpu_custom_call.1} parent=5 // pred_check_branch
        %208 = sbr.rel (%p205) target = $region12
      $region11: #{tpu_custom_call.1} parent=5 // pred_region
        %s209 = ssub.s32 %s17, 1
        // Predicated region
        $region13: #{tpu_custom_call.1} parent=11 // pred_check
          %p210 = pneg %p64
        $region14: #{tpu_custom_call.1} parent=11 // pred_check_branch
          %212 = sbr.rel (%p210) target = $region16
        $region15: #{tpu_custom_call.1} parent=11 // pred_region
          %s214 = ssub.s32 512, 512
          %215 = vsyncadd [#allocation5], %s214
          %s216 = sshll.u32 [#allocation4], 4
          %s217 = int_to_ptr.vmem [resolvable:$true] %s216
          %222 = dma.hbm_to_vmem [thread:$0]  %s1, 512, %s217, [#allocation5], 128, 128, 8
        $region16: #{tpu_custom_call.1} parent=11 // pred_fallthru
          _
        // Predicated region
        $region17: #{tpu_custom_call.1} parent=11 // pred_check
          %p223 = pneg %p85
        $region18: #{tpu_custom_call.1} parent=11 // pred_check_branch
          %225 = sbr.rel (%p223) target = $region20
        $region19: #{tpu_custom_call.1} parent=11 // pred_region
          _
        $region20: #{tpu_custom_call.1} parent=11 // pred_fallthru
          _
        // Predicated region
        $region21: #{tpu_custom_call.1} parent=11 // pred_check
          %p226 = pneg %p106
        $region22: #{tpu_custom_call.1} parent=11 // pred_check_branch
          %228 = sbr.rel (%p226) target = $region24
        $region23: #{tpu_custom_call.1} parent=11 // pred_region
          _
        $region24: #{tpu_custom_call.1} parent=11 // pred_fallthru
          _
        // Predicated region
        $region25: #{tpu_custom_call.1} parent=11 // pred_check
          %p229 = pneg %p127
        $region26: #{tpu_custom_call.1} parent=11 // pred_check_branch
          %231 = sbr.rel (%p229) target = $region28
        $region27: #{tpu_custom_call.1} parent=11 // pred_region
          _
        $region28: #{tpu_custom_call.1} parent=11 // pred_fallthru
          _
        // Predicated region
        $region29: #{tpu_custom_call.1} parent=11 // pred_check
          %p232 = pneg %p148
        $region30: #{tpu_custom_call.1} parent=11 // pred_check_branch
          %234 = sbr.rel (%p232) target = $region32
        $region31: #{tpu_custom_call.1} parent=11 // pred_region
          _
        $region32: #{tpu_custom_call.1} parent=11 // pred_fallthru
          _
        // Predicated region
        $region33: #{tpu_custom_call.1} parent=11 // pred_check
          %p235 = pneg %p169
        $region34: #{tpu_custom_call.1} parent=11 // pred_check_branch
          %237 = sbr.rel (%p235) target = $region36
        $region35: #{tpu_custom_call.1} parent=11 // pred_region
          _
        $region36: #{tpu_custom_call.1} parent=11 // pred_fallthru
          _
      $region12: #{tpu_custom_call.1} parent=5 // pred_fallthru
        _
      %p238 = scmp.lt.s32.totalorder %s17, 2
      // Predicated region
      $region37: #{tpu_custom_call.1} parent=5 // pred_check
        %p239 = pneg %p238
      $region38: #{tpu_custom_call.1} parent=5 // pred_check_branch
        %241 = sbr.rel (%p239) target = $region40
      $region39: #{tpu_custom_call.1} parent=5 // pred_region
        // Predicated region
        $region41: #{tpu_custom_call.1} parent=39 // pred_check
          %p242 = pneg %p37
        $region42: #{tpu_custom_call.1} parent=39 // pred_check_branch
          %244 = sbr.rel (%p242) target = $region44
        $region43: #{tpu_custom_call.1} parent=39 // pred_region
          %s245 = sand.u32 %s27, 1
          %s246 = scalar_lea.sflag [#allocation3], %s245
          %s247 = sand.u32 %s27, 1
          %s248 = smul.addr %s247, 16
          %s249 = scalar_lea.vmem [#allocation2], %s248
          %s250 = smul.u32 2, %s17
          %s251 = ssub.s32 3, %s250
          %p252 = scmp.lt.s32.totalorder %s251, 2
          %s253 = scalar_select %p252, %s251, 2
          %s254 = smul.u32 128, %s253
          %s256 = ssub.s32 256, %s254
          %257 = vsyncadd %s246, %s256
          %p258 = scmp.ne.s32.totalorder 0, %s254
          %s259 = smul.addr %s250, 128
          %s260 = scalar_lea.hbm %s0, %s259
          %s261 = smul.u32 8, %s253
          %s262 = sshll.u32 %s249, 4
          %s263 = int_to_ptr.vmem [resolvable:$true] %s262
          %s264 = sshll.u32 %s261, 4
          %268 = dma.hbm_to_vmem [thread:$0]  (%p258), %s260, %s264, %s263, %s246, 128, 128, 8
        $region44: #{tpu_custom_call.1} parent=39 // pred_fallthru
          _
      $region40: #{tpu_custom_call.1} parent=5 // pred_fallthru
        _
      %p269 = scmp.le.s32.totalorder 1, %s17
      %p270 = scmp.lt.s32.totalorder %s17, 3
      %p271 = pnand %p269, %p270
      %p272 = pneg %p271
      // Predicated region
      $region45: #{tpu_custom_call.1} parent=5 // pred_check
        _
      $region46: #{tpu_custom_call.1} parent=5 // pred_check_branch
        %274 = sbr.rel (%p271) target = $region48
      $region47: #{tpu_custom_call.1} parent=5 // pred_region
        %s275 = ssub.s32 %s17, 1
        %s276 = sand.u32 %s30, 1
        %s277 = scalar_lea.sflag [#allocation3], %s276
        %s278 = sand.u32 %s30, 1
        %s279 = smul.addr %s278, 16
        %s280 = scalar_lea.vmem [#allocation2], %s279
        // Predicated region
        $region49: #{tpu_custom_call.1} parent=47 // pred_check
          %p281 = pneg %p43
        $region50: #{tpu_custom_call.1} parent=47 // pred_check_branch
          %283 = sbr.rel (%p281) target = $region52
        $region51: #{tpu_custom_call.1} parent=47 // pred_region
          %284 = dma.done %s277, 256
        $region52: #{tpu_custom_call.1} parent=47 // pred_fallthru
          _
        // Predicated region
        $region53: #{tpu_custom_call.1} parent=47 // pred_check
          %p285 = pneg %p64
        $region54: #{tpu_custom_call.1} parent=47 // pred_check_branch
          %287 = sbr.rel (%p285) target = $region56
        $region55: #{tpu_custom_call.1} parent=47 // pred_region
          %288 = dma.done [#allocation5], 512
        $region56: #{tpu_custom_call.1} parent=47 // pred_fallthru
          _
        %s289 = sand.u32 %s30, 1
        %s290 = scalar_lea.sflag [#allocation3], %s289
        %s291 = sand.u32 %s30, 1
        %s292 = smul.addr %s291, 16
        %s293 = scalar_lea.vmem [#allocation2], %s292
        %p294 = pneg %p43
        %p295 = pneg %p40
        %p296 = pneg %p64
        %p297 = pneg %p61
        %p298 = pneg %p85
        %p299 = pneg %p82
        %p300 = pneg %p106
        %p301 = pneg %p103
        %p302 = pneg %p127
        %p303 = pneg %p124
        %p304 = pneg %p148
        %p305 = pneg %p145
        %p306 = pneg %p169
        %p307 = pneg %p166
        %p308 = pneg %p195
        %p309 = pneg %p192
        %s310 = sand.u32 %s182, 1
        %s311 = sand.u32 %s182, 1
        %s312 = smul.addr %s311, 16
        %s313 = scalar_lea.vmem [#allocation6], %s312
        %s314 = smul.u32 2, %s22
        %s315 = ssub.s32 3, %s314
        %p316 = scmp.lt.s32.totalorder %s315, 2
        %s317 = scalar_select %p316, %s315, 2
        %s318 = smul.u32 128, %s317
        %s319 = smul.u32 2, %s22
        %s320 = ssub.s32 3, %s319
        %p321 = scmp.lt.s32.totalorder %s320, 2
        %s322 = scalar_select %p321, %s320, 2
        %s323 = smul.u32 128, %s322
        %v324 = vld [vmem:[%s280] sm:$0xff]
        %v325 = vld [vmem:[%s280 + $0x8] sm:$0xff]
        %v326 = vld [vmem:[#allocation4] sm:$0xff]
        %v327 = vld [vmem:[#allocation4 + $0x8] sm:$0xff]
        %v328 = vld [vmem:[#allocation4 + $0x10] sm:$0xff]
        %v329 = vld [vmem:[#allocation4 + $0x18] sm:$0xff]
        %v330 = vld [vmem:[%s2] sm:$0x1]
        %v332 = vlaneseq
        %v333 = vshrl.u32 %v332, 7
        %v334 = vsub.s32 0, %v333
        %v335 = vrot.slane %v330, %v334
        %vm337 = vcmask 261120
        %v339 = vsel %vm337, %v324, 0
        %v342 = vsel %vm337, %v325, 0
        %344 = vmatprep.subr.mxu0 0.0
        %345 = vmatpush1.msra.mxu0 0.0
        %346 = vmatprep.subr.mxu0 0.0
        %347 = vmatpush1.msra.mxu0 0.0
        %348 = vmatprep.subr.mxu0 0.0
        %349 = vmatpush1.msra.mxu0 0.0
        %350 = vmatprep.subr.mxu0 0.0
        %351 = vmatpush1.msra.mxu0 0.0
        %352 = vmatprep.subr.mxu0 0.0
        %353 = vmatpush1.msra.mxu0 0.0
        %354 = vmatprep.subr.mxu0 0.0
        %355 = vmatpush1.msra.mxu0 0.0
        %356 = vmatprep.subr.mxu0 0.0
        %357 = vmatpush1.msra.mxu0 0.0
        %358 = vmatprep.subr.mxu0 0.0
        %359 = vmatpush1.msra.mxu0 0.0
        %360 = vmatprep.subr.mxu0 0.0
        %361 = vmatpush1.msra.mxu0 0.0
        %362 = vmatprep.subr.mxu0 0.0
        %363 = vmatpush1.msra.mxu0 0.0
        %364 = vmatprep.subr.mxu0 0.0
        %365 = vmatpush1.msra.mxu0 0.0
        %366 = vmatprep.subr.mxu0 0.0
        %367 = vmatpush1.msra.mxu0 0.0
        %368 = vmatprep.subr.mxu0 0.0
        %369 = vmatpush1.msra.mxu0 %v329
        %370 = vmatprep.subr.mxu0 0.0
        %371 = vmatpush1.msra.mxu0 %v328
        %372 = vmatprep.subr.mxu0 0.0
        %373 = vmatpush1.msra.mxu0 %v327
        %374 = vmatprep.subr.mxu0 0.0
        %375 = vmatpush1.msra.mxu0 %v326
        %376 = vmatprep.subr.mxu0 0.0
        %377 = vmatpush2.msra.mxu0 0.0
        %378 = vmatprep.subr.mxu0 0.0
        %379 = vmatpush2.msra.mxu0 0.0
        %380 = vmatprep.subr.mxu0 0.0
        %381 = vmatpush2.msra.mxu0 0.0
        %382 = vmatprep.subr.mxu0 0.0
        %383 = vmatpush2.msra.mxu0 0.0
        %384 = vmatprep.subr.mxu0 0.0
        %385 = vmatpush2.msra.mxu0 0.0
        %386 = vmatprep.subr.mxu0 0.0
        %387 = vmatpush2.msra.mxu0 0.0
        %388 = vmatprep.subr.mxu0 0.0
        %389 = vmatpush2.msra.mxu0 0.0
        %390 = vmatprep.subr.mxu0 0.0
        %391 = vmatpush2.msra.mxu0 0.0
        %392 = vmatprep.subr.mxu0 0.0
        %393 = vmatpush2.msra.mxu0 0.0
        %394 = vmatprep.subr.mxu0 0.0
        %395 = vmatpush2.msra.mxu0 0.0
        %396 = vmatprep.subr.mxu0 0.0
        %397 = vmatpush2.msra.mxu0 0.0
        %398 = vmatprep.subr.mxu0 0.0
        %399 = vmatpush2.msra.mxu0 0.0
        %400 = vmatprep.subr.mxu0 0.0
        %401 = vmatpush2.msra.mxu0 0.0
        %402 = vmatprep.subr.mxu0 0.0
        %403 = vmatpush2.msra.mxu0 0.0
        %404 = vmatprep.subr.mxu0 0.0
        %405 = vmatpush2.msra.mxu0 0.0
        %406 = vmatprep.subr.mxu0 0.0
        %407 = vmatpush2.msra.mxu0 0.0
        %408 = vmatprep.mubr.f32.mxu0 0.0
        %409 = vmatmul.mubr.f32.gmra.mxu0 %v339
        %v410 = vpop.f32.mrf.mxu0
        %v411 = vadd.f32 %v335, %v410
        %v412 = vpop.f32.mrf.mxu0
        %413 = vmatprep.mubr.f32.mxu0 0.0
        %414 = vmatmul.mubr.f32.gmra.mxu0 %v342
        %v415 = vpop.f32.mrf.mxu0
        %v416 = vadd.f32 %v335, %v415
        %v417 = vpop.f32.mrf.mxu0
        %418 = vdwg.mxu0
        %v419 = vtanh.pop %v411
        %v420 = vtanh.pop %v416
        %v421 = vld [vmem:[%s3] sm:$0xff]
        %v422 = vld [vmem:[%s3 + $0x8] sm:$0xff]
        %v423 = vld [vmem:[%s3 + $0x10] sm:$0xff]
        %v424 = vld [vmem:[%s3 + $0x18] sm:$0xff]
        %v425 = vld [vmem:[%s3 + $0x20] sm:$0xff]
        %v426 = vld [vmem:[%s3 + $0x28] sm:$0xff]
        %v427 = vld [vmem:[%s3 + $0x30] sm:$0xff]
        %v428 = vld [vmem:[%s3 + $0x38] sm:$0xff]
        %v429 = vld [vmem:[%s4] sm:$0x1]
        %v431 = vlaneseq
        %v432 = vshrl.u32 %v431, 7
        %v433 = vsub.s32 0, %v432
        %v434 = vrot.slane %v429, %v433
        %vm436 = vcmask 523264
        %v438 = vsel %vm436, %v419, 0
        %v441 = vsel %vm436, %v420, 0
        %443 = vmatprep.subr.mxu0 0.0
        %444 = vmatpush1.msra.mxu0 0.0
        %445 = vmatprep.subr.mxu0 0.0
        %446 = vmatpush1.msra.mxu0 0.0
        %447 = vmatprep.subr.mxu0 0.0
        %448 = vmatpush1.msra.mxu0 0.0
        %449 = vmatprep.subr.mxu0 0.0
        %450 = vmatpush1.msra.mxu0 0.0
        %451 = vmatprep.subr.mxu0 0.0
        %452 = vmatpush1.msra.mxu0 0.0
        %453 = vmatprep.subr.mxu0 0.0
        %454 = vmatpush1.msra.mxu0 0.0
        %455 = vmatprep.subr.mxu0 0.0
        %456 = vmatpush1.msra.mxu0 0.0
        %457 = vmatprep.subr.mxu0 0.0
        %458 = vmatpush1.msra.mxu0 0.0
        %459 = vmatprep.subr.mxu0 0.0
        %460 = vmatpush1.msra.mxu0 %v428
        %461 = vmatprep.subr.mxu0 0.0
        %462 = vmatpush1.msra.mxu0 %v427
        %463 = vmatprep.subr.mxu0 0.0
        %464 = vmatpush1.msra.mxu0 %v426
        %465 = vmatprep.subr.mxu0 0.0
        %466 = vmatpush1.msra.mxu0 %v425
        %467 = vmatprep.subr.mxu0 0.0
        %468 = vmatpush1.msra.mxu0 %v424
        %469 = vmatprep.subr.mxu0 0.0
        %470 = vmatpush1.msra.mxu0 %v423
        %471 = vmatprep.subr.mxu0 0.0
        %472 = vmatpush1.msra.mxu0 %v422
        %473 = vmatprep.subr.mxu0 0.0
        %474 = vmatpush1.msra.mxu0 %v421
        %475 = vmatprep.subr.mxu0 0.0
        %476 = vmatpush2.msra.mxu0 0.0
        %477 = vmatprep.subr.mxu0 0.0
        %478 = vmatpush2.msra.mxu0 0.0
        %479 = vmatprep.subr.mxu0 0.0
        %480 = vmatpush2.msra.mxu0 0.0
        %481 = vmatprep.subr.mxu0 0.0
        %482 = vmatpush2.msra.mxu0 0.0
        %483 = vmatprep.subr.mxu0 0.0
        %484 = vmatpush2.msra.mxu0 0.0
        %485 = vmatprep.subr.mxu0 0.0
        %486 = vmatpush2.msra.mxu0 0.0
        %487 = vmatprep.subr.mxu0 0.0
        %488 = vmatpush2.msra.mxu0 0.0
        %489 = vmatprep.subr.mxu0 0.0
        %490 = vmatpush2.msra.mxu0 0.0
        %491 = vmatprep.subr.mxu0 0.0
        %492 = vmatpush2.msra.mxu0 0.0
        %493 = vmatprep.subr.mxu0 0.0
        %494 = vmatpush2.msra.mxu0 0.0
        %495 = vmatprep.subr.mxu0 0.0
        %496 = vmatpush2.msra.mxu0 0.0
        %497 = vmatprep.subr.mxu0 0.0
        %498 = vmatpush2.msra.mxu0 0.0
        %499 = vmatprep.subr.mxu0 0.0
        %500 = vmatpush2.msra.mxu0 0.0
        %501 = vmatprep.subr.mxu0 0.0
        %502 = vmatpush2.msra.mxu0 0.0
        %503 = vmatprep.subr.mxu0 0.0
        %504 = vmatpush2.msra.mxu0 0.0
        %505 = vmatprep.subr.mxu0 0.0
        %506 = vmatpush2.msra.mxu0 0.0
        %507 = vmatprep.mubr.f32.mxu0 0.0
        %508 = vmatmul.mubr.f32.gmra.mxu0 %v438
        %v509 = vpop.f32.mrf.mxu0
        %v510 = vadd.f32 %v434, %v509
        %v511 = vpop.f32.mrf.mxu0
        %512 = vmatprep.mubr.f32.mxu0 0.0
        %513 = vmatmul.mubr.f32.gmra.mxu0 %v441
        %v514 = vpop.f32.mrf.mxu0
        %v515 = vadd.f32 %v434, %v514
        %v516 = vpop.f32.mrf.mxu0
        %517 = vdwg.mxu0
        %v518 = vtanh.pop %v510
        %v519 = vtanh.pop %v515
        %v520 = vld [vmem:[%s5] sm:$0xff]
        %v521 = vld [vmem:[%s5 + $0x8] sm:$0xff]
        %v522 = vld [vmem:[%s5 + $0x10] sm:$0xff]
        %v523 = vld [vmem:[%s5 + $0x18] sm:$0xff]
        %v524 = vld [vmem:[%s5 + $0x20] sm:$0xff]
        %v525 = vld [vmem:[%s5 + $0x28] sm:$0xff]
        %v526 = vld [vmem:[%s5 + $0x30] sm:$0xff]
        %v527 = vld [vmem:[%s5 + $0x38] sm:$0xff]
        %v528 = vld [vmem:[%s6] sm:$0x1]
        %v530 = vlaneseq
        %v531 = vshrl.u32 %v530, 7
        %v532 = vsub.s32 0, %v531
        %v533 = vrot.slane %v528, %v532
        %v536 = vsel %vm436, %v518, 0
        %v539 = vsel %vm436, %v519, 0
        %541 = vmatprep.subr.mxu0 0.0
        %542 = vmatpush1.msra.mxu0 0.0
        %543 = vmatprep.subr.mxu0 0.0
        %544 = vmatpush1.msra.mxu0 0.0
        %545 = vmatprep.subr.mxu0 0.0
        %546 = vmatpush1.msra.mxu0 0.0
        %547 = vmatprep.subr.mxu0 0.0
        %548 = vmatpush1.msra.mxu0 0.0
        %549 = vmatprep.subr.mxu0 0.0
        %550 = vmatpush1.msra.mxu0 0.0
        %551 = vmatprep.subr.mxu0 0.0
        %552 = vmatpush1.msra.mxu0 0.0
        %553 = vmatprep.subr.mxu0 0.0
        %554 = vmatpush1.msra.mxu0 0.0
        %555 = vmatprep.subr.mxu0 0.0
        %556 = vmatpush1.msra.mxu0 0.0
        %557 = vmatprep.subr.mxu0 0.0
        %558 = vmatpush1.msra.mxu0 %v527
        %559 = vmatprep.subr.mxu0 0.0
        %560 = vmatpush1.msra.mxu0 %v526
        %561 = vmatprep.subr.mxu0 0.0
        %562 = vmatpush1.msra.mxu0 %v525
        %563 = vmatprep.subr.mxu0 0.0
        %564 = vmatpush1.msra.mxu0 %v524
        %565 = vmatprep.subr.mxu0 0.0
        %566 = vmatpush1.msra.mxu0 %v523
        %567 = vmatprep.subr.mxu0 0.0
        %568 = vmatpush1.msra.mxu0 %v522
        %569 = vmatprep.subr.mxu0 0.0
        %570 = vmatpush1.msra.mxu0 %v521
        %571 = vmatprep.subr.mxu0 0.0
        %572 = vmatpush1.msra.mxu0 %v520
        %573 = vmatprep.subr.mxu0 0.0
        %574 = vmatpush2.msra.mxu0 0.0
        %575 = vmatprep.subr.mxu0 0.0
        %576 = vmatpush2.msra.mxu0 0.0
        %577 = vmatprep.subr.mxu0 0.0
        %578 = vmatpush2.msra.mxu0 0.0
        %579 = vmatprep.subr.mxu0 0.0
        %580 = vmatpush2.msra.mxu0 0.0
        %581 = vmatprep.subr.mxu0 0.0
        %582 = vmatpush2.msra.mxu0 0.0
        %583 = vmatprep.subr.mxu0 0.0
        %584 = vmatpush2.msra.mxu0 0.0
        %585 = vmatprep.subr.mxu0 0.0
        %586 = vmatpush2.msra.mxu0 0.0
        %587 = vmatprep.subr.mxu0 0.0
        %588 = vmatpush2.msra.mxu0 0.0
        %589 = vmatprep.subr.mxu0 0.0
        %590 = vmatpush2.msra.mxu0 0.0
        %591 = vmatprep.subr.mxu0 0.0
        %592 = vmatpush2.msra.mxu0 0.0
        %593 = vmatprep.subr.mxu0 0.0
        %594 = vmatpush2.msra.mxu0 0.0
        %595 = vmatprep.subr.mxu0 0.0
        %596 = vmatpush2.msra.mxu0 0.0
        %597 = vmatprep.subr.mxu0 0.0
        %598 = vmatpush2.msra.mxu0 0.0
        %599 = vmatprep.subr.mxu0 0.0
        %600 = vmatpush2.msra.mxu0 0.0
        %601 = vmatprep.subr.mxu0 0.0
        %602 = vmatpush2.msra.mxu0 0.0
        %603 = vmatprep.subr.mxu0 0.0
        %604 = vmatpush2.msra.mxu0 0.0
        %605 = vmatprep.mubr.f32.mxu0 0.0
        %606 = vmatmul.mubr.f32.gmra.mxu0 %v536
        %v607 = vpop.f32.mrf.mxu0
        %v608 = vadd.f32 %v533, %v607
        %v609 = vpop.f32.mrf.mxu0
        %610 = vmatprep.mubr.f32.mxu0 0.0
        %611 = vmatmul.mubr.f32.gmra.mxu0 %v539
        %v612 = vpop.f32.mrf.mxu0
        %v613 = vadd.f32 %v533, %v612
        %v614 = vpop.f32.mrf.mxu0
        %615 = vdwg.mxu0
        %vm616 = vcmask 130048
        %617 = vst.msk [vmem:[%s313] sm:$0xff] %vm616, %v608
        %618 = vst.msk [vmem:[%s313 + $0x8] sm:$0xff] %vm616, %v613
        %s619 = sand.u32 %s182, 1
        %s620 = sand.u32 %s182, 1
        %s621 = smul.addr %s620, 16
        %s622 = scalar_lea.vmem [#allocation6], %s621
        // Predicated region
        $region57: #{tpu_custom_call.1} parent=47 // pred_check
          %p623 = pneg %p192
        $region58: #{tpu_custom_call.1} parent=47 // pred_check_branch
          %625 = sbr.rel (%p623) target = $region60
        $region59: #{tpu_custom_call.1} parent=47 // pred_region
          %s626 = smul.u32 2, %s22
          %s627 = ssub.s32 3, %s626
          %p628 = scmp.lt.s32.totalorder %s627, 2
          %s629 = scalar_select %p628, %s627, 2
          %s630 = smul.u32 128, %s629
          %p631 = scmp.ne.s32.totalorder 0, %s630
          %s632 = smul.addr %s626, 8
          %s633 = scalar_lea.vmem %s7, %s632
          // Predicated region
          $region61: #{tpu_custom_call.1} parent=59 // pred_check
            %p634 = pneg %p631
          $region62: #{tpu_custom_call.1} parent=59 // pred_check_branch
            %636 = sbr.rel (%p634) target = $region64
          $region63: #{tpu_custom_call.1} parent=59 // pred_region
            // Predicated region
            $region65: #{tpu_custom_call.1} parent=63 // pred_check
              _
            $region66: #{tpu_custom_call.1} parent=63 // pred_check_branch
              %638 = sbr.rel (0) target = $region68
            $region67: #{tpu_custom_call.1} parent=63 // pred_region
              // Predicated region
              $region87: #{tpu_custom_call.1} parent=67 // pred_check
                _
              $region88: #{tpu_custom_call.1} parent=67 // pred_check_branch
                %690 = sbr.rel (0) target = $region90
              $region89: #{tpu_custom_call.1} parent=67 // pred_region
                %s691 = sshrl.u32 %s629, 1
                // While loop
                $region91: #{tpu_custom_call.1} parent=89 // loop_pre_header
                  _
                $region92: #{tpu_custom_call.1} parent=89 // loop_header
                  %s693 = sphi 0, %s695
                  %p694 = scmp.ge.s32.totalorder %s693, %s691
                  %s698 = sphi 0, %s707
                  %s699 = sphi %s622, %s710
                  %s700 = sphi %s633, %s711
                $region93: #{tpu_custom_call.1} parent=89 // loop_header_branch
                  %697 = sbr.rel (%p694) target = $region97
                $region94: #{tpu_custom_call.1} parent=89 // loop_body
                  %v701 = vld [vmem:[%s699] sm:$0xff]
                  %702 = vst [vmem:[%s700] sm:$0xff] %v701
                  %v703 = vld [vmem:[%s699 + $0x8] sm:$0xff]
                  %704 = vst [vmem:[%s700 + $0x8] sm:$0xff] %v703
                  %s705 = sadd.s32 1, %s698
                  %p706 = scmp.ge.s32.totalorder %s705, %s691
                  %s707 = scalar_select %p706, 0, %s705
                  %s708 = smul.u32 %s707, 16
                  %s709 = smul.u32 %s707, 16
                  %s710 = scalar_lea.vmem %s622, %s708 [#allocation6]
                  %s711 = scalar_lea.vmem %s633, %s709
                $region95: #{tpu_custom_call.1} parent=89 // loop_footer
                  %s695 = sadd.s32 %s693, 1
                $region96: #{tpu_custom_call.1} parent=89 // loop_footer_branch
                  %692 = sbr.rel target = $region92
                $region97: #{tpu_custom_call.1} parent=89 // loop_exit
                  _
                %s712 = sshrl.u32 %s629, 1
                %s713 = sand.u32 %s629, 1
                %s714 = smul.u32 %s712, 2
                %s715 = smul.u32 8, %s714
                %s716 = scalar_lea.vmem %s622, %s715 [#allocation6]
                %s717 = smul.u32 8, %s714
                %s718 = scalar_lea.vmem %s633, %s717
                // While loop
                $region98: #{tpu_custom_call.1} parent=89 // loop_pre_header
                  _
                $region99: #{tpu_custom_call.1} parent=89 // loop_header
                  %s720 = sphi 0, %s722
                  %p721 = scmp.ge.s32.totalorder %s720, %s713
                  %s725 = sphi 0, %s732
                  %s726 = sphi %s716, %s735
                  %s727 = sphi %s718, %s736
                $region100: #{tpu_custom_call.1} parent=89 // loop_header_branch
                  %724 = sbr.rel (%p721) target = $region104
                $region101: #{tpu_custom_call.1} parent=89 // loop_body
                  %v728 = vld [vmem:[%s726] sm:$0xff]
                  %729 = vst [vmem:[%s727] sm:$0xff] %v728
                  %s730 = sadd.s32 1, %s725
                  %p731 = scmp.ge.s32.totalorder %s730, %s713
                  %s732 = scalar_select %p731, 0, %s730
                  %s733 = smul.u32 %s732, 8
                  %s734 = smul.u32 %s732, 8
                  %s735 = scalar_lea.vmem %s716, %s733 [#allocation6]
                  %s736 = scalar_lea.vmem %s718, %s734
                $region102: #{tpu_custom_call.1} parent=89 // loop_footer
                  %s722 = sadd.s32 %s720, 1
                $region103: #{tpu_custom_call.1} parent=89 // loop_footer_branch
                  %719 = sbr.rel target = $region99
                $region104: #{tpu_custom_call.1} parent=89 // loop_exit
                  _
              $region90: #{tpu_custom_call.1} parent=67 // pred_fallthru
                _
              // Predicated region
              $region105: #{tpu_custom_call.1} parent=67 // pred_check
                _
              $region106: #{tpu_custom_call.1} parent=67 // pred_check_branch
                %738 = sbr.rel target = $region108
              $region107: #{tpu_custom_call.1} parent=67 // pred_region
                _
              $region108: #{tpu_custom_call.1} parent=67 // pred_fallthru
                _
            $region68: #{tpu_custom_call.1} parent=63 // pred_fallthru
              _
            // Predicated region
            $region69: #{tpu_custom_call.1} parent=63 // pred_check
              _
            $region70: #{tpu_custom_call.1} parent=63 // pred_check_branch
              %640 = sbr.rel target = $region72
            $region71: #{tpu_custom_call.1} parent=63 // pred_region
              %s642 = ssub.s32 256, 1
              %s643 = sshrl.u32 %s629, 1
              // While loop
              $region73: #{tpu_custom_call.1} parent=71 // loop_pre_header
                _
              $region74: #{tpu_custom_call.1} parent=71 // loop_header
                %s645 = sphi 0, %s647
                %p646 = scmp.ge.s32.totalorder %s645, %s643
                %s650 = sphi 0, %s659
                %s651 = sphi %s622, %s662
                %s652 = sphi %s633, %s663
              $region75: #{tpu_custom_call.1} parent=71 // loop_header_branch
                %649 = sbr.rel (%p646) target = $region79
              $region76: #{tpu_custom_call.1} parent=71 // loop_body
                %v653 = vld [vmem:[%s651] sm:%s642]
                %654 = vst [vmem:[%s652] sm:%s642] %v653
                %v655 = vld [vmem:[%s651 + $0x8] sm:%s642]
                %656 = vst [vmem:[%s652 + $0x8] sm:%s642] %v655
                %s657 = sadd.s32 1, %s650
                %p658 = scmp.ge.s32.totalorder %s657, %s643
                %s659 = scalar_select %p658, 0, %s657
                %s660 = smul.u32 %s659, 16
                %s661 = smul.u32 %s659, 16
                %s662 = scalar_lea.vmem %s622, %s660 [#allocation6]
                %s663 = scalar_lea.vmem %s633, %s661
              $region77: #{tpu_custom_call.1} parent=71 // loop_footer
                %s647 = sadd.s32 %s645, 1
              $region78: #{tpu_custom_call.1} parent=71 // loop_footer_branch
                %644 = sbr.rel target = $region74
              $region79: #{tpu_custom_call.1} parent=71 // loop_exit
                _
              %s664 = sshrl.u32 %s629, 1
              %s665 = sand.u32 %s629, 1
              %s666 = smul.u32 %s664, 2
              %s667 = smul.u32 8, %s666
              %s668 = scalar_lea.vmem %s622, %s667 [#allocation6]
              %s669 = smul.u32 8, %s666
              %s670 = scalar_lea.vmem %s633, %s669
              // While loop
              $region80: #{tpu_custom_call.1} parent=71 // loop_pre_header
                _
              $region81: #{tpu_custom_call.1} parent=71 // loop_header
                %s672 = sphi 0, %s674
                %p673 = scmp.ge.s32.totalorder %s672, %s665
                %s677 = sphi 0, %s684
                %s678 = sphi %s668, %s687
                %s679 = sphi %s670, %s688
              $region82: #{tpu_custom_call.1} parent=71 // loop_header_branch
                %676 = sbr.rel (%p673) target = $region86
              $region83: #{tpu_custom_call.1} parent=71 // loop_body
                %v680 = vld [vmem:[%s678] sm:%s642]
                %681 = vst [vmem:[%s679] sm:%s642] %v680
                %s682 = sadd.s32 1, %s677
                %p683 = scmp.ge.s32.totalorder %s682, %s665
                %s684 = scalar_select %p683, 0, %s682
                %s685 = smul.u32 %s684, 8
                %s686 = smul.u32 %s684, 8
                %s687 = scalar_lea.vmem %s668, %s685 [#allocation6]
                %s688 = scalar_lea.vmem %s670, %s686
              $region84: #{tpu_custom_call.1} parent=71 // loop_footer
                %s674 = sadd.s32 %s672, 1
              $region85: #{tpu_custom_call.1} parent=71 // loop_footer_branch
                %671 = sbr.rel target = $region81
              $region86: #{tpu_custom_call.1} parent=71 // loop_exit
                _
            $region72: #{tpu_custom_call.1} parent=63 // pred_fallthru
              _
          $region64: #{tpu_custom_call.1} parent=59 // pred_fallthru
            _
          %739 = vnop
        $region60: #{tpu_custom_call.1} parent=47 // pred_fallthru
          _
      $region48: #{tpu_custom_call.1} parent=5 // pred_fallthru
        _
      %p740 = scmp.le.s32.totalorder 2, %s17
      // Predicated region
      $region109: #{tpu_custom_call.1} parent=5 // pred_check
        %p741 = pneg %p740
      $region110: #{tpu_custom_call.1} parent=5 // pred_check_branch
        %743 = sbr.rel (%p741) target = $region112
      $region111: #{tpu_custom_call.1} parent=5 // pred_region
        %s744 = ssub.s32 %s17, 2
        // Predicated region
        $region113: #{tpu_custom_call.1} parent=111 // pred_check
          %p745 = pneg %p198
        $region114: #{tpu_custom_call.1} parent=111 // pred_check_branch
          %747 = sbr.rel (%p745) target = $region116
        $region115: #{tpu_custom_call.1} parent=111 // pred_region
          %s748 = sand.u32 %s183, 1
          %s749 = sand.u32 %s183, 1
          %s750 = smul.addr %s749, 16
          %s751 = scalar_lea.vmem [#allocation6], %s750
        $region116: #{tpu_custom_call.1} parent=111 // pred_fallthru
          _
      $region112: #{tpu_custom_call.1} parent=5 // pred_fallthru
        _
    $region6: #{tpu_custom_call.1} parent=1 // loop_footer
      %s21 = sadd.s32 1, %s17
    $region7: #{tpu_custom_call.1} parent=1 // loop_footer_branch
      %16 = sbr.rel target = $region3
    $region8: #{tpu_custom_call.1} parent=1 // loop_exit
      _
    %752 = vsyncpa [#allocation3], 1
    %s753 = scalar_lea.sflag [#allocation3], 1
    %754 = vsyncpa %s753, 1
    %755 = vsyncpa [#allocation5], 1

</llo_original>
